<compile_context>
chip_gen: v7x
topology: tpu7x:2x2x1
jax: 0.10.0
libtpu: 0.0.40
codegen_flags: <defaults>
</compile_context>

<pallas_src>
import functools

import jax
import jax.numpy as jnp
from jax.experimental import pallas as pl
from jax.experimental.pallas import tpu as pltpu

LATENT_DIM = 100
HIDDEN_DIM = 256
IMAGE_DIM = 28 * 28          # 784
LATENT_PAD = 128             # 100 -> 128 (lane aligned; col 100 == 1 for bias fold)

# Layer-3 output-column slabs (starts are 128-aligned: 256, 256, 272 lanes).
_L3_SLABS = ((0, 256), (256, 512), (512, IMAGE_DIM))


def _round_up(x, m):
    return (x + m - 1) // m * m


def _generator_kernel(z_ref, w1_ref, w2_ref, b2_ref, w3_ref, b3_ref, o_ref):
    """Fused 3-layer MLP for one batch tile.

    All matmuls run on the MXU with bf16 operands and f32 accumulation;
    ReLU / bias-add run on the VPU, tanh on the EUP, on VMEM-resident tiles.
    Layer-1 bias is folded into w1 (via the constant-1 padded column of z).
    Layer 3 streams over output-column slabs so compute and stores pipeline.
    """
    # Layer 1: relu(z_pad @ w1_pad)  ==  relu(z @ w1 + b1)
    h1 = jnp.dot(z_ref[...], w1_ref[...], preferred_element_type=jnp.float32)
    h1 = jnp.maximum(h1, 0.0).astype(jnp.bfloat16)

    # Layer 2: relu(h1 @ w2 + b2)
    h2 = jnp.dot(h1, w2_ref[...], preferred_element_type=jnp.float32)
    h2 = jnp.maximum(h2 + b2_ref[...], 0.0).astype(jnp.bfloat16)

    # Layer 3: tanh(h2 @ w3 + b3), streamed slab-by-slab over output columns.
    for s, e in _L3_SLABS:
        w = e - s
        h3 = jnp.dot(h2, w3_ref[:, pl.ds(s, w)],
                     preferred_element_type=jnp.float32)
        y = jnp.tanh(h3 + b3_ref[:, pl.ds(s, w)])
        o_ref[:, pl.ds(s, w)] = y.astype(o_ref.dtype)


@functools.partial(jax.jit, static_argnames=("batch_tile", "out_dtype"))
def generator_forward(z, params, *, batch_tile=512, out_dtype=jnp.bfloat16):
    """Runs the fused generator MLP as a single Pallas kernel.

    z: (B, LATENT_DIM) float32 (any B; padded internally).
    Returns img of shape (B, 1, 28, 28), dtype `out_dtype` (default bf16 for
    HBM-write-bound throughput; pass jnp.float32 for PyTorch-exact dtype).
    """
    w1, b1, w2, b2, w3, b3 = params
    B = z.shape[0]
    assert z.shape == (B, LATENT_DIM)

    # Batch tile: big enough to amortize per-step overhead, but capped at
    # ceil(B/2) (rounded to 16 for bf16 sublanes) so the grid has >= 2 steps
    # whenever B >= 32 -> both v7x TensorCores get work on the parallel axis.
    half = -(-B // 2)
    tile = max(16, min(_round_up(batch_tile, 16), _round_up(half, 16)))
    Bp = _round_up(B, tile)
    grid = (Bp // tile,)

    # ---- host-side packing / padding (cheap glue, fused by XLA) -------------
    # z: (B,100) f32 -> (Bp,128) bf16, with a constant-1 column at index 100
    # that carries the layer-1 bias (folded into w1_pad row 100 below).
    z_pad = jnp.zeros((Bp, LATENT_PAD), jnp.bfloat16)
    z_pad = z_pad.at[:B, :LATENT_DIM].set(z.astype(jnp.bfloat16))
    z_pad = z_pad.at[:B, LATENT_DIM].set(1.0)

    # w1: (100,256) -> (128,256) bf16, row 100 = b1 (bias fold).
    w1_pad = jnp.zeros((LATENT_PAD, HIDDEN_DIM), jnp.bfloat16)
    w1_pad = w1_pad.at[:LATENT_DIM, :].set(w1.astype(jnp.bfloat16))
    w1_pad = w1_pad.at[LATENT_DIM, :].set(b1.astype(jnp.bfloat16))

    w2_b = w2.astype(jnp.bfloat16)
    b2_2d = b2.reshape(1, HIDDEN_DIM).astype(jnp.float32)
    w3_b = w3.astype(jnp.bfloat16)                         # (256, 784), no pad
    b3_2d = b3.reshape(1, IMAGE_DIM).astype(jnp.float32)

    out_itemsize = jnp.dtype(out_dtype).itemsize
    cost = pl.CostEstimate(
        flops=2 * Bp * (LATENT_PAD * HIDDEN_DIM
                        + HIDDEN_DIM * HIDDEN_DIM
                        + HIDDEN_DIM * IMAGE_DIM),
        transcendentals=Bp * IMAGE_DIM,
        bytes_accessed=(Bp * LATENT_PAD * 2
                        + LATENT_PAD * HIDDEN_DIM * 2
                        + HIDDEN_DIM * HIDDEN_DIM * 2
                        + HIDDEN_DIM * 4
                        + HIDDEN_DIM * IMAGE_DIM * 2
                        + IMAGE_DIM * 4
                        + Bp * IMAGE_DIM * out_itemsize),
    )

    # Weights (< ~0.7 MiB bf16) have constant block indices, so the pipeline
    # does not re-DMA them per step; per-step activation footprint at tile=512
    # is a few MiB, well under the explicit 32 MiB scoped-VMEM limit below
    # (and every generation's physical VMEM).
    flat = pl.pallas_call(
        _generator_kernel,
        out_shape=jax.ShapeDtypeStruct((Bp, IMAGE_DIM), out_dtype),
        grid=grid,
        in_specs=[
            pl.BlockSpec((tile, LATENT_PAD), lambda i: (i, 0)),       # z (padded)
            pl.BlockSpec((LATENT_PAD, HIDDEN_DIM), lambda i: (0, 0)), # w1 (+b1)
            pl.BlockSpec((HIDDEN_DIM, HIDDEN_DIM), lambda i: (0, 0)), # w2
            pl.BlockSpec((1, HIDDEN_DIM), lambda i: (0, 0)),          # b2
            pl.BlockSpec((HIDDEN_DIM, IMAGE_DIM), lambda i: (0, 0)),  # w3
            pl.BlockSpec((1, IMAGE_DIM), lambda i: (0, 0)),           # b3
        ],
        out_specs=pl.BlockSpec((tile, IMAGE_DIM), lambda i: (i, 0)),
        compiler_params=pltpu.CompilerParams(
            # Batch axis shards across TensorCores on v7x; on v5e/v6e it is a
            # plain sequential loop.  (If a trace shows it not sharding on
            # v7x, switch this axis to pltpu.CORE_PARALLEL.)
            dimension_semantics=("parallel",),
            vmem_limit_bytes=32 * 1024 * 1024,
        ),
        cost_estimate=cost,
    )(z_pad, w1_pad, w2_b, b2_2d, w3_b, b3_2d)

    # Glue: drop batch padding (only when present), NCHW view — exactly
    # img.view(B, 1, 28, 28) in PyTorch.  No column de-pad pass anymore.
    if Bp != B:
        flat = flat[:B]
    return flat.reshape(B, 1, 28, 28)


def init_generator_params(key):
    """Deterministic init matching nn.Linear's default U(-1/sqrt(fan_in), +)."""
    ks = jax.random.split(key, 6)

    def linear(kw, kb, fan_in, fan_out):
        bound = 1.0 / jnp.sqrt(jnp.float32(fan_in))
        w = jax.random.uniform(kw, (fan_in, fan_out), jnp.float32,
                               minval=-bound, maxval=bound)
        b = jax.random.uniform(kb, (fan_out,), jnp.float32,
                               minval=-bound, maxval=bound)
        return w, b

    w1, b1 = linear(ks[0], ks[1], LATENT_DIM, HIDDEN_DIM)
    w2, b2 = linear(ks[2], ks[3], HIDDEN_DIM, HIDDEN_DIM)
    w3, b3 = linear(ks[4], ks[5], HIDDEN_DIM, IMAGE_DIM)
    return (w1, b1, w2, b2, w3, b3)


def _reference_f32(z, params):
    """Plain-JAX f32 reference with PyTorch semantics (highest precision)."""
    w1, b1, w2, b2, w3, b3 = params
    hp = jax.lax.Precision.HIGHEST
    h1 = jnp.maximum(jnp.dot(z, w1, precision=hp) + b1, 0.0)
    h2 = jnp.maximum(jnp.dot(h1, w2, precision=hp) + b2, 0.0)
    img = jnp.tanh(jnp.dot(h2, w3, precision=hp) + b3)
    return img.reshape(z.shape[0], 1, 28, 28)


if __name__ == "__main__":
    key = jax.random.PRNGKey(0)
    k_params, k_z1, k_z2 = jax.random.split(key, 3)

    params = init_generator_params(k_params)

    # Small batch, default bf16 output (single grid step, tiny tile clamp).
    B1 = 8
    z1 = jax.random.normal(k_z1, (B1, LATENT_DIM), dtype=jnp.float32)
    img1 = jax.block_until_ready(generator_forward(z1, params))
    assert img1.shape == (B1, 1, 28, 28)
    assert img1.dtype == jnp.bfloat16
    err1 = float(jnp.max(jnp.abs(img1.astype(jnp.float32)
                                 - _reference_f32(z1, params))))
    # bf16 operands + bf16 output vs. full-f32 reference => loose tolerance.
    assert err1 < 4e-2, f"max abs err (B={B1}, bf16 out) = {err1}"

    # Non-multiple batch, f32 output path (PyTorch-exact dtype): exercises
    # batch padding and a 2-step "parallel" grid (tile capped at ceil(B/2)).
    B2 = 300
    z2 = jax.random.normal(k_z2, (B2, LATENT_DIM), dtype=jnp.float32)
    img2 = jax.block_until_ready(
        generator_forward(z2, params, out_dtype=jnp.float32))
    assert img2.shape == (B2, 1, 28, 28)
    assert img2.dtype == jnp.float32
    err2 = float(jnp.max(jnp.abs(img2 - _reference_f32(z2, params))))
    assert err2 < 4e-2, f"max abs err (B={B2}, f32 out) = {err2}"

    print("KERNEL_OK")
</pallas_src>

<mosaic_0001>
module attributes {stable_mosaic.version = 11 : i64} {
  func.func @_generator_kernel(%arg0: i32, %arg1: memref<16x128xbf16, #tpu.memory_space<vmem>>, %arg2: memref<128x256xbf16, #tpu.memory_space<vmem>>, %arg3: memref<256x256xbf16, #tpu.memory_space<vmem>>, %arg4: memref<1x256xf32, #tpu.memory_space<vmem>>, %arg5: memref<256x784xbf16, #tpu.memory_space<vmem>>, %arg6: memref<1x784xf32, #tpu.memory_space<vmem>>, %arg7: memref<16x784xbf16, #tpu.memory_space<vmem>>) attributes {dimension_semantics = [#tpu.dimension_semantics<parallel>], iteration_bounds = array<i64: 1>, scalar_prefetch = 0 : i64, scratch_operands = 0 : i64, tpu.core_type = #tpu.core_type<tc>, window_params = [{transform_indices = @transform_0, window_bounds = array<i64: 16, 128>}, {pipeline_mode = #tpu.pipeline_mode<synchronous>, transform_indices = @transform_1, window_bounds = array<i64: 128, 256>}, {pipeline_mode = #tpu.pipeline_mode<synchronous>, transform_indices = @transform_2, window_bounds = array<i64: 256, 256>}, {pipeline_mode = #tpu.pipeline_mode<synchronous>, transform_indices = @transform_3, window_bounds = array<i64: 1, 256>}, {pipeline_mode = #tpu.pipeline_mode<synchronous>, transform_indices = @transform_4, window_bounds = array<i64: 256, 784>}, {pipeline_mode = #tpu.pipeline_mode<synchronous>, transform_indices = @transform_5, window_bounds = array<i64: 1, 784>}, {transform_indices = @transform_6, window_bounds = array<i64: 16, 784>}]} {
    %c0 = arith.constant 0 : index
    %c0_0 = arith.constant 0 : index
    %0 = vector.load %arg1[%c0, %c0_0] : memref<16x128xbf16, #tpu.memory_space<vmem>>, vector<16x128xbf16>
    %c0_1 = arith.constant 0 : index
    %c0_2 = arith.constant 0 : index
    %1 = vector.load %arg2[%c0_1, %c0_2] : memref<128x256xbf16, #tpu.memory_space<vmem>>, vector<128x256xbf16>
    %cst = arith.constant dense<0.000000e+00> : vector<16x256xf32>
    %2 = tpu.matmul %0, %1, %cst {dimension_numbers = #tpu.dot_dimension_numbers<[1], [0], [0], [1], [0, 0, 1, 1], [], []>} : vector<16x128xbf16>, vector<128x256xbf16>, vector<16x256xf32> -> vector<16x256xf32>
    %cst_3 = arith.constant 0.000000e+00 : f32
    %3 = vector.broadcast %cst_3 : f32 to vector<16x256xf32>
    %4 = arith.maximumf %2, %3 : vector<16x256xf32>
    %5 = arith.truncf %4 : vector<16x256xf32> to vector<16x256xbf16>
    %c0_4 = arith.constant 0 : index
    %c0_5 = arith.constant 0 : index
    %6 = vector.load %arg3[%c0_4, %c0_5] : memref<256x256xbf16, #tpu.memory_space<vmem>>, vector<256x256xbf16>
    %cst_6 = arith.constant dense<0.000000e+00> : vector<16x256xf32>
    %7 = tpu.matmul %5, %6, %cst_6 {dimension_numbers = #tpu.dot_dimension_numbers<[1], [0], [0], [1], [0, 0, 1, 1], [], []>} : vector<16x256xbf16>, vector<256x256xbf16>, vector<16x256xf32> -> vector<16x256xf32>
    %c0_7 = arith.constant 0 : index
    %c0_8 = arith.constant 0 : index
    %8 = vector.load %arg4[%c0_7, %c0_8] : memref<1x256xf32, #tpu.memory_space<vmem>>, vector<1x256xf32>
    %9 = vector.broadcast %8 : vector<1x256xf32> to vector<16x256xf32>
    %10 = arith.addf %7, %9 : vector<16x256xf32>
    %cst_9 = arith.constant 0.000000e+00 : f32
    %11 = vector.broadcast %cst_9 : f32 to vector<16x256xf32>
    %12 = arith.maximumf %10, %11 : vector<16x256xf32>
    %13 = arith.truncf %12 : vector<16x256xf32> to vector<16x256xbf16>
    %c0_10 = arith.constant 0 : index
    %c0_11 = arith.constant 0 : index
    %14 = vector.load %arg5[%c0_10, %c0_11] : memref<256x784xbf16, #tpu.memory_space<vmem>>, vector<256x256xbf16>
    %cst_12 = arith.constant dense<0.000000e+00> : vector<16x256xf32>
    %15 = tpu.matmul %13, %14, %cst_12 {dimension_numbers = #tpu.dot_dimension_numbers<[1], [0], [0], [1], [0, 0, 1, 1], [], []>} : vector<16x256xbf16>, vector<256x256xbf16>, vector<16x256xf32> -> vector<16x256xf32>
    %c0_13 = arith.constant 0 : index
    %c0_14 = arith.constant 0 : index
    %16 = vector.load %arg6[%c0_13, %c0_14] : memref<1x784xf32, #tpu.memory_space<vmem>>, vector<1x256xf32>
    %17 = vector.broadcast %16 : vector<1x256xf32> to vector<16x256xf32>
    %18 = arith.addf %15, %17 : vector<16x256xf32>
    %19 = math.tanh %18 : vector<16x256xf32>
    %20 = arith.truncf %19 : vector<16x256xf32> to vector<16x256xbf16>
    %c0_15 = arith.constant 0 : index
    %c0_16 = arith.constant 0 : index
    %21 = vector.load %arg7[%c0_15, %c0_16] : memref<16x784xbf16, #tpu.memory_space<vmem>>, vector<16x256xbf16>
    tpu.vector_store %arg7[%c0_15, %c0_16], %20 {strides = array<i32>} : memref<16x784xbf16, #tpu.memory_space<vmem>>, vector<16x256xbf16>,
    %c0_17 = arith.constant 0 : index
    %c256 = arith.constant 256 : index
    %22 = vector.load %arg5[%c0_17, %c256] : memref<256x784xbf16, #tpu.memory_space<vmem>>, vector<256x256xbf16>
    %cst_18 = arith.constant dense<0.000000e+00> : vector<16x256xf32>
    %23 = tpu.matmul %13, %22, %cst_18 {dimension_numbers = #tpu.dot_dimension_numbers<[1], [0], [0], [1], [0, 0, 1, 1], [], []>} : vector<16x256xbf16>, vector<256x256xbf16>, vector<16x256xf32> -> vector<16x256xf32>
    %c0_19 = arith.constant 0 : index
    %c256_20 = arith.constant 256 : index
    %24 = vector.load %arg6[%c0_19, %c256_20] : memref<1x784xf32, #tpu.memory_space<vmem>>, vector<1x256xf32>
    %25 = vector.broadcast %24 : vector<1x256xf32> to vector<16x256xf32>
    %26 = arith.addf %23, %25 : vector<16x256xf32>
    %27 = math.tanh %26 : vector<16x256xf32>
    %28 = arith.truncf %27 : vector<16x256xf32> to vector<16x256xbf16>
    %c0_21 = arith.constant 0 : index
    %c256_22 = arith.constant 256 : index
    %29 = vector.load %arg7[%c0_21, %c256_22] : memref<16x784xbf16, #tpu.memory_space<vmem>>, vector<16x256xbf16>
    tpu.vector_store %arg7[%c0_21, %c256_22], %28 {strides = array<i32>} : memref<16x784xbf16, #tpu.memory_space<vmem>>, vector<16x256xbf16>,
    %c0_23 = arith.constant 0 : index
    %c512 = arith.constant 512 : index
    %30 = vector.load %arg5[%c0_23, %c512] : memref<256x784xbf16, #tpu.memory_space<vmem>>, vector<256x272xbf16>
    %cst_24 = arith.constant dense<0.000000e+00> : vector<16x272xf32>
    %31 = tpu.matmul %13, %30, %cst_24 {dimension_numbers = #tpu.dot_dimension_numbers<[1], [0], [0], [1], [0, 0, 1, 1], [], []>} : vector<16x256xbf16>, vector<256x272xbf16>, vector<16x272xf32> -> vector<16x272xf32>
    %c0_25 = arith.constant 0 : index
    %c512_26 = arith.constant 512 : index
    %32 = vector.load %arg6[%c0_25, %c512_26] : memref<1x784xf32, #tpu.memory_space<vmem>>, vector<1x272xf32>
    %33 = vector.broadcast %32 : vector<1x272xf32> to vector<16x272xf32>
    %34 = arith.addf %31, %33 : vector<16x272xf32>
    %35 = math.tanh %34 : vector<16x272xf32>
    %36 = arith.truncf %35 : vector<16x272xf32> to vector<16x272xbf16>
    %c0_27 = arith.constant 0 : index
    %c512_28 = arith.constant 512 : index
    %37 = vector.load %arg7[%c0_27, %c512_28] : memref<16x784xbf16, #tpu.memory_space<vmem>>, vector<16x272xbf16>
    tpu.vector_store %arg7[%c0_27, %c512_28], %36 {strides = array<i32>} : memref<16x784xbf16, #tpu.memory_space<vmem>>, vector<16x272xbf16>,
    return
  }
  func.func @transform_0(%arg0: i32) -> (i32, i32) {
    %c0_i32 = arith.constant 0 : i32
    %c0_i32_0 = arith.constant 0 : i32
    return %arg0, %c0_i32 : i32, i32
  }
  func.func @transform_1(%arg0: i32) -> (i32, i32) {
    %c0_i32 = arith.constant 0 : i32
    %c0_i32_0 = arith.constant 0 : i32
    %c0_i32_1 = arith.constant 0 : i32
    return %c0_i32, %c0_i32_0 : i32, i32
  }
  func.func @transform_2(%arg0: i32) -> (i32, i32) {
    %c0_i32 = arith.constant 0 : i32
    %c0_i32_0 = arith.constant 0 : i32
    %c0_i32_1 = arith.constant 0 : i32
    return %c0_i32, %c0_i32_0 : i32, i32
  }
  func.func @transform_3(%arg0: i32) -> (i32, i32) {
    %c0_i32 = arith.constant 0 : i32
    %c0_i32_0 = arith.constant 0 : i32
    %c0_i32_1 = arith.constant 0 : i32
    return %c0_i32, %c0_i32_0 : i32, i32
  }
  func.func @transform_4(%arg0: i32) -> (i32, i32) {
    %c0_i32 = arith.constant 0 : i32
    %c0_i32_0 = arith.constant 0 : i32
    %c0_i32_1 = arith.constant 0 : i32
    return %c0_i32, %c0_i32_0 : i32, i32
  }
  func.func @transform_5(%arg0: i32) -> (i32, i32) {
    %c0_i32 = arith.constant 0 : i32
    %c0_i32_0 = arith.constant 0 : i32
    %c0_i32_1 = arith.constant 0 : i32
    return %c0_i32, %c0_i32_0 : i32, i32
  }
  func.func @transform_6(%arg0: i32) -> (i32, i32) {
    %c0_i32 = arith.constant 0 : i32
    %c0_i32_0 = arith.constant 0 : i32
    return %arg0, %c0_i32 : i32, i32
  }
}

</mosaic_0001>

<llo_original>
// kernel: generator_forward.1
$region0: #{generator_forward.1}
  #allocation0 [shape = 'u32[]', space=smem, size = 0x4, offset = 0x4, fixed_abs, tag = 'smem constant byte address 0x4 - core index']
  #allocation1 [shape = 'u32[144,128]{1,0:T(1,128)}', space=vmem, size = 0x12000, scoped, tag = 'internal scratch']
  %s0 = inlined_call_operand.vmem [shape: bf16[16,128], index: 0, kind: input, shape index: {}]
  %s1 = inlined_call_operand.vmem [shape: bf16[128,256], index: 1, kind: input, shape index: {}]
  %s2 = inlined_call_operand.vmem [shape: bf16[256,256], index: 2, kind: input, shape index: {}]
  %s3 = inlined_call_operand.vmem [shape: f32[1,256], index: 3, kind: input, shape index: {}]
  %s4 = inlined_call_operand.vmem [shape: bf16[256,784], index: 4, kind: input, shape index: {}]
  %s5 = inlined_call_operand.vmem [shape: f32[1,784], index: 5, kind: input, shape index: {}]
  %s6 = inlined_call_operand.vmem [shape: bf16[16,784], index: 6, kind: output, shape index: {}]
  %s7 = sld [smem:[#allocation0]]
  $region34: #{generator_forward.1} parent=0
    _
  %s9 = ssub.s32 1, %s7
  %s10 = scalar_select 0, %s9, %s7
  // Predicated region
  $region2: #{generator_forward.1} parent=0 // pred_check
    _
  $region3: #{generator_forward.1} parent=0 // pred_check_branch
    %12 = sbr.rel (0) target = $region5
  $region4: #{generator_forward.1} parent=0 // pred_region
    _
  $region5: #{generator_forward.1} parent=0 // pred_fallthru
    _
  // Predicated region
  $region6: #{generator_forward.1} parent=0 // pred_check
    _
  $region7: #{generator_forward.1} parent=0 // pred_check_branch
    %14 = sbr.rel (0) target = $region9
  $region8: #{generator_forward.1} parent=0 // pred_region
    _
  $region9: #{generator_forward.1} parent=0 // pred_fallthru
    _
  // Predicated region
  $region10: #{generator_forward.1} parent=0 // pred_check
    _
  $region11: #{generator_forward.1} parent=0 // pred_check_branch
    %16 = sbr.rel (0) target = $region13
  $region12: #{generator_forward.1} parent=0 // pred_region
    _
  $region13: #{generator_forward.1} parent=0 // pred_fallthru
    _
  // Predicated region
  $region14: #{generator_forward.1} parent=0 // pred_check
    _
  $region15: #{generator_forward.1} parent=0 // pred_check_branch
    %18 = sbr.rel (0) target = $region17
  $region16: #{generator_forward.1} parent=0 // pred_region
    _
  $region17: #{generator_forward.1} parent=0 // pred_fallthru
    _
  // Predicated region
  $region18: #{generator_forward.1} parent=0 // pred_check
    _
  $region19: #{generator_forward.1} parent=0 // pred_check_branch
    %20 = sbr.rel (0) target = $region21
  $region20: #{generator_forward.1} parent=0 // pred_region
    _
  $region21: #{generator_forward.1} parent=0 // pred_fallthru
    _
  // Predicated region
  $region22: #{generator_forward.1} parent=0 // pred_check
    _
  $region23: #{generator_forward.1} parent=0 // pred_check_branch
    %22 = sbr.rel (0) target = $region25
  $region24: #{generator_forward.1} parent=0 // pred_region
    _
  $region25: #{generator_forward.1} parent=0 // pred_fallthru
    _
  %v24 = vld [vmem:[%s0] sm:$0xf]
  %v25 = vld [vmem:[%s0 + $0x4] sm:$0xf]
  %v26 = vld [vmem:[%s1] sm:$0xff]
  %v27 = vld [vmem:[%s1 + $0x8] sm:$0xff]
  %v28 = vld [vmem:[%s1 + $0x10] sm:$0xff]
  %v29 = vld [vmem:[%s1 + $0x18] sm:$0xff]
  %v30 = vld [vmem:[%s1 + $0x20] sm:$0xff]
  %v31 = vld [vmem:[%s1 + $0x28] sm:$0xff]
  %v32 = vld [vmem:[%s1 + $0x30] sm:$0xff]
  %v33 = vld [vmem:[%s1 + $0x38] sm:$0xff]
  %v34 = vld [vmem:[%s1 + $0x40] sm:$0xff]
  %v35 = vld [vmem:[%s1 + $0x48] sm:$0xff]
  %v36 = vld [vmem:[%s1 + $0x50] sm:$0xff]
  %v37 = vld [vmem:[%s1 + $0x58] sm:$0xff]
  %v38 = vld [vmem:[%s1 + $0x60] sm:$0xff]
  %v39 = vld [vmem:[%s1 + $0x68] sm:$0xff]
  %v40 = vld [vmem:[%s1 + $0x70] sm:$0xff]
  %v41 = vld [vmem:[%s1 + $0x78] sm:$0xff]
  %v44 = vunpack.c.l.b16 %v24
  %v45 = vunpack.c.l.b16 %v25
  %v46 = vpack.c.b16 %v45, %v44
  %v64 = vunpack.c.l.b16 %v26
  %v65 = vunpack.c.h.b16 %v26
  %v66 = vunpack.c.l.b16 %v27
  %v67 = vunpack.c.h.b16 %v27
  %v68 = vunpack.c.l.b16 %v28
  %v69 = vunpack.c.h.b16 %v28
  %v70 = vunpack.c.l.b16 %v29
  %v71 = vunpack.c.h.b16 %v29
  %v72 = vunpack.c.l.b16 %v30
  %v73 = vunpack.c.h.b16 %v30
  %v74 = vunpack.c.l.b16 %v31
  %v75 = vunpack.c.h.b16 %v31
  %v76 = vunpack.c.l.b16 %v32
  %v77 = vunpack.c.h.b16 %v32
  %v78 = vunpack.c.l.b16 %v33
  %v79 = vunpack.c.h.b16 %v33
  %v80 = vunpack.c.l.b16 %v34
  %v81 = vunpack.c.h.b16 %v34
  %v82 = vunpack.c.l.b16 %v35
  %v83 = vunpack.c.h.b16 %v35
  %v84 = vunpack.c.l.b16 %v36
  %v85 = vunpack.c.h.b16 %v36
  %v86 = vunpack.c.l.b16 %v37
  %v87 = vunpack.c.h.b16 %v37
  %v88 = vunpack.c.l.b16 %v38
  %v89 = vunpack.c.h.b16 %v38
  %v90 = vunpack.c.l.b16 %v39
  %v91 = vunpack.c.h.b16 %v39
  %v92 = vunpack.c.l.b16 %v40
  %v93 = vunpack.c.h.b16 %v40
  %v94 = vunpack.c.l.b16 %v41
  %v95 = vunpack.c.h.b16 %v41
  %v96 = vpack.c.b16 %v66, %v64
  %v97 = vpack.c.b16 %v67, %v65
  %v98 = vpack.c.b16 %v70, %v68
  %v99 = vpack.c.b16 %v71, %v69
  %v100 = vpack.c.b16 %v74, %v72
  %v101 = vpack.c.b16 %v75, %v73
  %v102 = vpack.c.b16 %v78, %v76
  %v103 = vpack.c.b16 %v79, %v77
  %v104 = vpack.c.b16 %v82, %v80
  %v105 = vpack.c.b16 %v83, %v81
  %v106 = vpack.c.b16 %v86, %v84
  %v107 = vpack.c.b16 %v87, %v85
  %v108 = vpack.c.b16 %v90, %v88
  %v109 = vpack.c.b16 %v91, %v89
  %v110 = vpack.c.b16 %v94, %v92
  %v111 = vpack.c.b16 %v95, %v93
  %128 = vmatprep.subr.bf16.mxu0 %v97
  %129 = vmatpush1.bf16.msra.mxu0 %v96
  %130 = vmatprep.subr.bf16.mxu0 %v99
  %131 = vmatpush1.bf16.msra.mxu0 %v98
  %132 = vmatprep.subr.bf16.mxu0 %v101
  %133 = vmatpush1.bf16.msra.mxu0 %v100
  %134 = vmatprep.subr.bf16.mxu0 %v103
  %135 = vmatpush1.bf16.msra.mxu0 %v102
  %136 = vmatprep.subr.bf16.mxu0 %v105
  %137 = vmatpush1.bf16.msra.mxu0 %v104
  %138 = vmatprep.subr.bf16.mxu0 %v107
  %139 = vmatpush1.bf16.msra.mxu0 %v106
  %140 = vmatprep.subr.bf16.mxu0 %v109
  %141 = vmatpush1.bf16.msra.mxu0 %v108
  %142 = vmatprep.subr.bf16.mxu0 %v111
  %143 = vmatpush1.bf16.msra.mxu0 %v110
  %144 = vmatprep.subr.bf16.mxu0 0
  %145 = vmatpush1.bf16.msra.mxu0 0
  %146 = vmatprep.subr.bf16.mxu0 0
  %147 = vmatpush1.bf16.msra.mxu0 0
  %148 = vmatprep.subr.bf16.mxu0 0
  %149 = vmatpush1.bf16.msra.mxu0 0
  %150 = vmatprep.subr.bf16.mxu0 0
  %151 = vmatpush1.bf16.msra.mxu0 0
  %152 = vmatprep.subr.bf16.mxu0 0
  %153 = vmatpush1.bf16.msra.mxu0 0
  %154 = vmatprep.subr.bf16.mxu0 0
  %155 = vmatpush1.bf16.msra.mxu0 0
  %156 = vmatprep.subr.bf16.mxu0 0
  %157 = vmatpush1.bf16.msra.mxu0 0
  %158 = vmatprep.subr.bf16.mxu0 0
  %159 = vmatpush1.bf16.msra.mxu0 0
  %160 = vmatprep.mubr.bf16.mxu0 0
  %161 = vmatmul.mubr.bf16.gmra.mrb[0].mxu0 %v46
  %v162 = vpop.f32.mrb[0].mxu0
  %v163 = vadd.f32 0.0, %v162
  %v164 = vpop.f32.mrb[0].mxu0
  %v165 = vadd.f32 0.0, %v164
  %v166 = vpop.f32.mrb[0].mxu0
  %v167 = vadd.f32 0.0, %v166
  %v168 = vpop.f32.mrb[0].mxu0
  %v169 = vadd.f32 0.0, %v168
  %170 = vdwg.mxu0
  %v171 = vmax.f32 %v163, 0.0
  %v172 = vmax.f32 %v165, 0.0
  %v173 = vmax.f32 %v167, 0.0
  %v174 = vmax.f32 %v169, 0.0
  %v175 = vpack.c.bf16 %v173, %v171
  %v176 = vpack.c.bf16 %v174, %v172
  %v177 = vld [vmem:[%s2] sm:$0xff]
  %v178 = vld [vmem:[%s2 + $0x8] sm:$0xff]
  %v179 = vld [vmem:[%s2 + $0x10] sm:$0xff]
  %v180 = vld [vmem:[%s2 + $0x18] sm:$0xff]
  %v181 = vld [vmem:[%s2 + $0x20] sm:$0xff]
  %v182 = vld [vmem:[%s2 + $0x28] sm:$0xff]
  %v183 = vld [vmem:[%s2 + $0x30] sm:$0xff]
  %v184 = vld [vmem:[%s2 + $0x38] sm:$0xff]
  %v185 = vld [vmem:[%s2 + $0x40] sm:$0xff]
  %v186 = vld [vmem:[%s2 + $0x48] sm:$0xff]
  %v187 = vld [vmem:[%s2 + $0x50] sm:$0xff]
  %v188 = vld [vmem:[%s2 + $0x58] sm:$0xff]
  %v189 = vld [vmem:[%s2 + $0x60] sm:$0xff]
  %v190 = vld [vmem:[%s2 + $0x68] sm:$0xff]
  %v191 = vld [vmem:[%s2 + $0x70] sm:$0xff]
  %v192 = vld [vmem:[%s2 + $0x78] sm:$0xff]
  %v193 = vld [vmem:[%s2 + $0x80] sm:$0xff]
  %v194 = vld [vmem:[%s2 + $0x88] sm:$0xff]
  %v195 = vld [vmem:[%s2 + $0x90] sm:$0xff]
  %v196 = vld [vmem:[%s2 + $0x98] sm:$0xff]
  %v197 = vld [vmem:[%s2 + $0xa0] sm:$0xff]
  %v198 = vld [vmem:[%s2 + $0xa8] sm:$0xff]
  %v199 = vld [vmem:[%s2 + $0xb0] sm:$0xff]
  %v200 = vld [vmem:[%s2 + $0xb8] sm:$0xff]
  %v201 = vld [vmem:[%s2 + $0xc0] sm:$0xff]
  %v202 = vld [vmem:[%s2 + $0xc8] sm:$0xff]
  %v203 = vld [vmem:[%s2 + $0xd0] sm:$0xff]
  %v204 = vld [vmem:[%s2 + $0xd8] sm:$0xff]
  %v205 = vld [vmem:[%s2 + $0xe0] sm:$0xff]
  %v206 = vld [vmem:[%s2 + $0xe8] sm:$0xff]
  %v207 = vld [vmem:[%s2 + $0xf0] sm:$0xff]
  %v208 = vld [vmem:[%s2 + $0xf8] sm:$0xff]
  %v209 = vld [vmem:[%s3] sm:$0x3]
  %v211 = vlaneseq
  %v212 = vshrl.u32 %v211, 7
  %v213 = vsub.s32 0, %v212
  %v214 = vrot.slane %v209, %v213
  %v215 = vlaneseq
  %v216 = vshrl.u32 %v215, 7
  %v217 = vsub.s32 1, %v216
  %v218 = vrot.slane %v209, %v217
  %v253 = vunpack.c.l.b16 %v177
  %v254 = vunpack.c.h.b16 %v177
  %v255 = vunpack.c.l.b16 %v178
  %v256 = vunpack.c.h.b16 %v178
  %v257 = vunpack.c.l.b16 %v179
  %v258 = vunpack.c.h.b16 %v179
  %v259 = vunpack.c.l.b16 %v180
  %v260 = vunpack.c.h.b16 %v180
  %v261 = vunpack.c.l.b16 %v181
  %v262 = vunpack.c.h.b16 %v181
  %v263 = vunpack.c.l.b16 %v182
  %v264 = vunpack.c.h.b16 %v182
  %v265 = vunpack.c.l.b16 %v183
  %v266 = vunpack.c.h.b16 %v183
  %v267 = vunpack.c.l.b16 %v184
  %v268 = vunpack.c.h.b16 %v184
  %v269 = vunpack.c.l.b16 %v185
  %v270 = vunpack.c.h.b16 %v185
  %v271 = vunpack.c.l.b16 %v186
  %v272 = vunpack.c.h.b16 %v186
  %v273 = vunpack.c.l.b16 %v187
  %v274 = vunpack.c.h.b16 %v187
  %v275 = vunpack.c.l.b16 %v188
  %v276 = vunpack.c.h.b16 %v188
  %v277 = vunpack.c.l.b16 %v189
  %v278 = vunpack.c.h.b16 %v189
  %v279 = vunpack.c.l.b16 %v190
  %v280 = vunpack.c.h.b16 %v190
  %v281 = vunpack.c.l.b16 %v191
  %v282 = vunpack.c.h.b16 %v191
  %v283 = vunpack.c.l.b16 %v192
  %v284 = vunpack.c.h.b16 %v192
  %v285 = vunpack.c.l.b16 %v193
  %v286 = vunpack.c.h.b16 %v193
  %v287 = vunpack.c.l.b16 %v194
  %v288 = vunpack.c.h.b16 %v194
  %v289 = vunpack.c.l.b16 %v195
  %v290 = vunpack.c.h.b16 %v195
  %v291 = vunpack.c.l.b16 %v196
  %v292 = vunpack.c.h.b16 %v196
  %v293 = vunpack.c.l.b16 %v197
  %v294 = vunpack.c.h.b16 %v197
  %v295 = vunpack.c.l.b16 %v198
  %v296 = vunpack.c.h.b16 %v198
  %v297 = vunpack.c.l.b16 %v199
  %v298 = vunpack.c.h.b16 %v199
  %v299 = vunpack.c.l.b16 %v200
  %v300 = vunpack.c.h.b16 %v200
  %v301 = vunpack.c.l.b16 %v201
  %v302 = vunpack.c.h.b16 %v201
  %v303 = vunpack.c.l.b16 %v202
  %v304 = vunpack.c.h.b16 %v202
  %v305 = vunpack.c.l.b16 %v203
  %v306 = vunpack.c.h.b16 %v203
  %v307 = vunpack.c.l.b16 %v204
  %v308 = vunpack.c.h.b16 %v204
  %v309 = vunpack.c.l.b16 %v205
  %v310 = vunpack.c.h.b16 %v205
  %v311 = vunpack.c.l.b16 %v206
  %v312 = vunpack.c.h.b16 %v206
  %v313 = vunpack.c.l.b16 %v207
  %v314 = vunpack.c.h.b16 %v207
  %v315 = vunpack.c.l.b16 %v208
  %v316 = vunpack.c.h.b16 %v208
  %v317 = vpack.c.b16 %v255, %v253
  %v318 = vpack.c.b16 %v256, %v254
  %v319 = vpack.c.b16 %v259, %v257
  %v320 = vpack.c.b16 %v260, %v258
  %v321 = vpack.c.b16 %v263, %v261
  %v322 = vpack.c.b16 %v264, %v262
  %v323 = vpack.c.b16 %v267, %v265
  %v324 = vpack.c.b16 %v268, %v266
  %v325 = vpack.c.b16 %v271, %v269
  %v326 = vpack.c.b16 %v272, %v270
  %v327 = vpack.c.b16 %v275, %v273
  %v328 = vpack.c.b16 %v276, %v274
  %v329 = vpack.c.b16 %v279, %v277
  %v330 = vpack.c.b16 %v280, %v278
  %v331 = vpack.c.b16 %v283, %v281
  %v332 = vpack.c.b16 %v284, %v282
  %v333 = vpack.c.b16 %v287, %v285
  %v334 = vpack.c.b16 %v288, %v286
  %v335 = vpack.c.b16 %v291, %v289
  %v336 = vpack.c.b16 %v292, %v290
  %v337 = vpack.c.b16 %v295, %v293
  %v338 = vpack.c.b16 %v296, %v294
  %v339 = vpack.c.b16 %v299, %v297
  %v340 = vpack.c.b16 %v300, %v298
  %v341 = vpack.c.b16 %v303, %v301
  %v342 = vpack.c.b16 %v304, %v302
  %v343 = vpack.c.b16 %v307, %v305
  %v344 = vpack.c.b16 %v308, %v306
  %v345 = vpack.c.b16 %v311, %v309
  %v346 = vpack.c.b16 %v312, %v310
  %v347 = vpack.c.b16 %v315, %v313
  %v348 = vpack.c.b16 %v316, %v314
  %381 = vmatprep.subr.bf16.mxu0 %v318
  %382 = vmatpush1.bf16.msra.mxu0 %v317
  %383 = vmatprep.subr.bf16.mxu0 %v320
  %384 = vmatpush1.bf16.msra.mxu0 %v319
  %385 = vmatprep.subr.bf16.mxu0 %v322
  %386 = vmatpush1.bf16.msra.mxu0 %v321
  %387 = vmatprep.subr.bf16.mxu0 %v324
  %388 = vmatpush1.bf16.msra.mxu0 %v323
  %389 = vmatprep.subr.bf16.mxu0 %v326
  %390 = vmatpush1.bf16.msra.mxu0 %v325
  %391 = vmatprep.subr.bf16.mxu0 %v328
  %392 = vmatpush1.bf16.msra.mxu0 %v327
  %393 = vmatprep.subr.bf16.mxu0 %v330
  %394 = vmatpush1.bf16.msra.mxu0 %v329
  %395 = vmatprep.subr.bf16.mxu0 %v332
  %396 = vmatpush1.bf16.msra.mxu0 %v331
  %397 = vmatprep.subr.bf16.mxu0 %v334
  %398 = vmatpush1.bf16.msra.mxu0 %v333
  %399 = vmatprep.subr.bf16.mxu0 %v336
  %400 = vmatpush1.bf16.msra.mxu0 %v335
  %401 = vmatprep.subr.bf16.mxu0 %v338
  %402 = vmatpush1.bf16.msra.mxu0 %v337
  %403 = vmatprep.subr.bf16.mxu0 %v340
  %404 = vmatpush1.bf16.msra.mxu0 %v339
  %405 = vmatprep.subr.bf16.mxu0 %v342
  %406 = vmatpush1.bf16.msra.mxu0 %v341
  %407 = vmatprep.subr.bf16.mxu0 %v344
  %408 = vmatpush1.bf16.msra.mxu0 %v343
  %409 = vmatprep.subr.bf16.mxu0 %v346
  %410 = vmatpush1.bf16.msra.mxu0 %v345
  %411 = vmatprep.subr.bf16.mxu0 %v348
  %412 = vmatpush1.bf16.msra.mxu0 %v347
  %413 = vmatprep.mubr.bf16.mxu0 %v176
  %414 = vmatmul.mubr.bf16.gmra.mrb[0].mxu0 %v175
  %v415 = vpop.f32.mrb[0].mxu0
  %v416 = vadd.f32 %v214, %v415
  %v417 = vpop.f32.mrb[0].mxu0
  %v418 = vadd.f32 %v218, %v417
  %v419 = vpop.f32.mrb[0].mxu0
  %v420 = vadd.f32 %v214, %v419
  %v421 = vpop.f32.mrb[0].mxu0
  %v422 = vadd.f32 %v218, %v421
  %423 = vdwg.mxu0
  %v424 = vmax.f32 %v416, 0.0
  %v425 = vmax.f32 %v418, 0.0
  %v426 = vmax.f32 %v420, 0.0
  %v427 = vmax.f32 %v422, 0.0
  %v428 = vpack.c.bf16 %v426, %v424
  %v429 = vpack.c.bf16 %v427, %v425
  %v430 = vld [vmem:[%s4] sm:$0xff]
  %v431 = vld [vmem:[%s4 + $0x1c] sm:$0xff]
  %v432 = vld [vmem:[%s4 + $0x38] sm:$0xff]
  %v433 = vld [vmem:[%s4 + $0x54] sm:$0xff]
  %v434 = vld [vmem:[%s4 + $0x70] sm:$0xff]
  %v435 = vld [vmem:[%s4 + $0x8c] sm:$0xff]
  %v436 = vld [vmem:[%s4 + $0xa8] sm:$0xff]
  %v437 = vld [vmem:[%s4 + $0xc4] sm:$0xff]
  %v438 = vld [vmem:[%s4 + $0xe0] sm:$0xff]
  %v439 = vld [vmem:[%s4 + $0xfc] sm:$0xff]
  %v440 = vld [vmem:[%s4 + $0x118] sm:$0xff]
  %v441 = vld [vmem:[%s4 + $0x134] sm:$0xff]
  %v442 = vld [vmem:[%s4 + $0x150] sm:$0xff]
  %v443 = vld [vmem:[%s4 + $0x16c] sm:$0xff]
  %v444 = vld [vmem:[%s4 + $0x188] sm:$0xff]
  %v445 = vld [vmem:[%s4 + $0x1a4] sm:$0xff]
  %v446 = vld [vmem:[%s4 + $0x1c0] sm:$0xff]
  %v447 = vld [vmem:[%s4 + $0x1dc] sm:$0xff]
  %v448 = vld [vmem:[%s4 + $0x1f8] sm:$0xff]
  %v449 = vld [vmem:[%s4 + $0x214] sm:$0xff]
  %v450 = vld [vmem:[%s4 + $0x230] sm:$0xff]
  %v451 = vld [vmem:[%s4 + $0x24c] sm:$0xff]
  %v452 = vld [vmem:[%s4 + $0x268] sm:$0xff]
  %v453 = vld [vmem:[%s4 + $0x284] sm:$0xff]
  %v454 = vld [vmem:[%s4 + $0x2a0] sm:$0xff]
  %v455 = vld [vmem:[%s4 + $0x2bc] sm:$0xff]
  %v456 = vld [vmem:[%s4 + $0x2d8] sm:$0xff]
  %v457 = vld [vmem:[%s4 + $0x2f4] sm:$0xff]
  %v458 = vld [vmem:[%s4 + $0x310] sm:$0xff]
  %v459 = vld [vmem:[%s4 + $0x32c] sm:$0xff]
  %v460 = vld [vmem:[%s4 + $0x348] sm:$0xff]
  %v461 = vld [vmem:[%s4 + $0x364] sm:$0xff]
  %v462 = vld [vmem:[%s5] sm:$0x3]
  %v464 = vlaneseq
  %v465 = vshrl.u32 %v464, 7
  %v466 = vsub.s32 0, %v465
  %v467 = vrot.slane %v462, %v466
  %v468 = vlaneseq
  %v469 = vshrl.u32 %v468, 7
  %v470 = vsub.s32 1, %v469
  %v471 = vrot.slane %v462, %v470
  %v506 = vunpack.c.l.b16 %v430
  %v507 = vunpack.c.h.b16 %v430
  %v508 = vunpack.c.l.b16 %v431
  %v509 = vunpack.c.h.b16 %v431
  %v510 = vunpack.c.l.b16 %v432
  %v511 = vunpack.c.h.b16 %v432
  %v512 = vunpack.c.l.b16 %v433
  %v513 = vunpack.c.h.b16 %v433
  %v514 = vunpack.c.l.b16 %v434
  %v515 = vunpack.c.h.b16 %v434
  %v516 = vunpack.c.l.b16 %v435
  %v517 = vunpack.c.h.b16 %v435
  %v518 = vunpack.c.l.b16 %v436
  %v519 = vunpack.c.h.b16 %v436
  %v520 = vunpack.c.l.b16 %v437
  %v521 = vunpack.c.h.b16 %v437
  %v522 = vunpack.c.l.b16 %v438
  %v523 = vunpack.c.h.b16 %v438
  %v524 = vunpack.c.l.b16 %v439
  %v525 = vunpack.c.h.b16 %v439
  %v526 = vunpack.c.l.b16 %v440
  %v527 = vunpack.c.h.b16 %v440
  %v528 = vunpack.c.l.b16 %v441
  %v529 = vunpack.c.h.b16 %v441
  %v530 = vunpack.c.l.b16 %v442
  %v531 = vunpack.c.h.b16 %v442
  %v532 = vunpack.c.l.b16 %v443
  %v533 = vunpack.c.h.b16 %v443
  %v534 = vunpack.c.l.b16 %v444
  %v535 = vunpack.c.h.b16 %v444
  %v536 = vunpack.c.l.b16 %v445
  %v537 = vunpack.c.h.b16 %v445
  %v538 = vunpack.c.l.b16 %v446
  %v539 = vunpack.c.h.b16 %v446
  %v540 = vunpack.c.l.b16 %v447
  %v541 = vunpack.c.h.b16 %v447
  %v542 = vunpack.c.l.b16 %v448
  %v543 = vunpack.c.h.b16 %v448
  %v544 = vunpack.c.l.b16 %v449
  %v545 = vunpack.c.h.b16 %v449
  %v546 = vunpack.c.l.b16 %v450
  %v547 = vunpack.c.h.b16 %v450
  %v548 = vunpack.c.l.b16 %v451
  %v549 = vunpack.c.h.b16 %v451
  %v550 = vunpack.c.l.b16 %v452
  %v551 = vunpack.c.h.b16 %v452
  %v552 = vunpack.c.l.b16 %v453
  %v553 = vunpack.c.h.b16 %v453
  %v554 = vunpack.c.l.b16 %v454
  %v555 = vunpack.c.h.b16 %v454
  %v556 = vunpack.c.l.b16 %v455
  %v557 = vunpack.c.h.b16 %v455
  %v558 = vunpack.c.l.b16 %v456
  %v559 = vunpack.c.h.b16 %v456
  %v560 = vunpack.c.l.b16 %v457
  %v561 = vunpack.c.h.b16 %v457
  %v562 = vunpack.c.l.b16 %v458
  %v563 = vunpack.c.h.b16 %v458
  %v564 = vunpack.c.l.b16 %v459
  %v565 = vunpack.c.h.b16 %v459
  %v566 = vunpack.c.l.b16 %v460
  %v567 = vunpack.c.h.b16 %v460
  %v568 = vunpack.c.l.b16 %v461
  %v569 = vunpack.c.h.b16 %v461
  %v570 = vpack.c.b16 %v508, %v506
  %v571 = vpack.c.b16 %v509, %v507
  %v572 = vpack.c.b16 %v512, %v510
  %v573 = vpack.c.b16 %v513, %v511
  %v574 = vpack.c.b16 %v516, %v514
  %v575 = vpack.c.b16 %v517, %v515
  %v576 = vpack.c.b16 %v520, %v518
  %v577 = vpack.c.b16 %v521, %v519
  %v578 = vpack.c.b16 %v524, %v522
  %v579 = vpack.c.b16 %v525, %v523
  %v580 = vpack.c.b16 %v528, %v526
  %v581 = vpack.c.b16 %v529, %v527
  %v582 = vpack.c.b16 %v532, %v530
  %v583 = vpack.c.b16 %v533, %v531
  %v584 = vpack.c.b16 %v536, %v534
  %v585 = vpack.c.b16 %v537, %v535
  %v586 = vpack.c.b16 %v540, %v538
  %v587 = vpack.c.b16 %v541, %v539
  %v588 = vpack.c.b16 %v544, %v542
  %v589 = vpack.c.b16 %v545, %v543
  %v590 = vpack.c.b16 %v548, %v546
  %v591 = vpack.c.b16 %v549, %v547
  %v592 = vpack.c.b16 %v552, %v550
  %v593 = vpack.c.b16 %v553, %v551
  %v594 = vpack.c.b16 %v556, %v554
  %v595 = vpack.c.b16 %v557, %v555
  %v596 = vpack.c.b16 %v560, %v558
  %v597 = vpack.c.b16 %v561, %v559
  %v598 = vpack.c.b16 %v564, %v562
  %v599 = vpack.c.b16 %v565, %v563
  %v600 = vpack.c.b16 %v568, %v566
  %v601 = vpack.c.b16 %v569, %v567
  %634 = vmatprep.subr.bf16.mxu0 %v571
  %635 = vmatpush1.bf16.msra.mxu0 %v570
  %636 = vmatprep.subr.bf16.mxu0 %v573
  %637 = vmatpush1.bf16.msra.mxu0 %v572
  %638 = vmatprep.subr.bf16.mxu0 %v575
  %639 = vmatpush1.bf16.msra.mxu0 %v574
  %640 = vmatprep.subr.bf16.mxu0 %v577
  %641 = vmatpush1.bf16.msra.mxu0 %v576
  %642 = vmatprep.subr.bf16.mxu0 %v579
  %643 = vmatpush1.bf16.msra.mxu0 %v578
  %644 = vmatprep.subr.bf16.mxu0 %v581
  %645 = vmatpush1.bf16.msra.mxu0 %v580
  %646 = vmatprep.subr.bf16.mxu0 %v583
  %647 = vmatpush1.bf16.msra.mxu0 %v582
  %648 = vmatprep.subr.bf16.mxu0 %v585
  %649 = vmatpush1.bf16.msra.mxu0 %v584
  %650 = vmatprep.subr.bf16.mxu0 %v587
  %651 = vmatpush1.bf16.msra.mxu0 %v586
  %652 = vmatprep.subr.bf16.mxu0 %v589
  %653 = vmatpush1.bf16.msra.mxu0 %v588
  %654 = vmatprep.subr.bf16.mxu0 %v591
  %655 = vmatpush1.bf16.msra.mxu0 %v590
  %656 = vmatprep.subr.bf16.mxu0 %v593
  %657 = vmatpush1.bf16.msra.mxu0 %v592
  %658 = vmatprep.subr.bf16.mxu0 %v595
  %659 = vmatpush1.bf16.msra.mxu0 %v594
  %660 = vmatprep.subr.bf16.mxu0 %v597
  %661 = vmatpush1.bf16.msra.mxu0 %v596
  %662 = vmatprep.subr.bf16.mxu0 %v599
  %663 = vmatpush1.bf16.msra.mxu0 %v598
  %664 = vmatprep.subr.bf16.mxu0 %v601
  %665 = vmatpush1.bf16.msra.mxu0 %v600
  %666 = vmatprep.mubr.bf16.mxu0 %v429
  %667 = vmatmul.mubr.bf16.gmra.mrb[0].mxu0 %v428
  %v668 = vpop.f32.mrb[0].mxu0
  %v669 = vadd.f32 %v467, %v668
  %v670 = vpop.f32.mrb[0].mxu0
  %v671 = vadd.f32 %v471, %v670
  %v672 = vpop.f32.mrb[0].mxu0
  %v673 = vadd.f32 %v467, %v672
  %v674 = vpop.f32.mrb[0].mxu0
  %v675 = vadd.f32 %v471, %v674
  %676 = vdwg.mxu0
  %v677 = vtanh.pop %v669
  %v678 = vtanh.pop %v671
  %v679 = vtanh.pop %v673
  %v680 = vtanh.pop %v675
  %v681 = vpack.c.bf16 %v679, %v677
  %v682 = vpack.c.bf16 %v680, %v678
  %v685 = vunpack.c.l.b16 %v681
  %v686 = vunpack.c.l.b16 %v682
  %v687 = vunpack.c.h.b16 %v681
  %v688 = vunpack.c.h.b16 %v682
  %v689 = vpack.c.b16 %v686, %v685
  %v690 = vpack.c.b16 %v688, %v687
  %693 = vst [vmem:[%s6] sm:$0xff] %v689
  %694 = vst [vmem:[%s6 + $0x1c] sm:$0xff] %v690
  %v695 = vld [vmem:[%s4 + $0x8] sm:$0xff]
  %v696 = vld [vmem:[%s4 + $0x24] sm:$0xff]
  %v697 = vld [vmem:[%s4 + $0x40] sm:$0xff]
  %v698 = vld [vmem:[%s4 + $0x5c] sm:$0xff]
  %v699 = vld [vmem:[%s4 + $0x78] sm:$0xff]
  %v700 = vld [vmem:[%s4 + $0x94] sm:$0xff]
  %v701 = vld [vmem:[%s4 + $0xb0] sm:$0xff]
  %v702 = vld [vmem:[%s4 + $0xcc] sm:$0xff]
  %v703 = vld [vmem:[%s4 + $0xe8] sm:$0xff]
  %v704 = vld [vmem:[%s4 + $0x104] sm:$0xff]
  %v705 = vld [vmem:[%s4 + $0x120] sm:$0xff]
  %v706 = vld [vmem:[%s4 + $0x13c] sm:$0xff]
  %v707 = vld [vmem:[%s4 + $0x158] sm:$0xff]
  %v708 = vld [vmem:[%s4 + $0x174] sm:$0xff]
  %v709 = vld [vmem:[%s4 + $0x190] sm:$0xff]
  %v710 = vld [vmem:[%s4 + $0x1ac] sm:$0xff]
  %v711 = vld [vmem:[%s4 + $0x1c8] sm:$0xff]
  %v712 = vld [vmem:[%s4 + $0x1e4] sm:$0xff]
  %v713 = vld [vmem:[%s4 + $0x200] sm:$0xff]
  %v714 = vld [vmem:[%s4 + $0x21c] sm:$0xff]
  %v715 = vld [vmem:[%s4 + $0x238] sm:$0xff]
  %v716 = vld [vmem:[%s4 + $0x254] sm:$0xff]
  %v717 = vld [vmem:[%s4 + $0x270] sm:$0xff]
  %v718 = vld [vmem:[%s4 + $0x28c] sm:$0xff]
  %v719 = vld [vmem:[%s4 + $0x2a8] sm:$0xff]
  %v720 = vld [vmem:[%s4 + $0x2c4] sm:$0xff]
  %v721 = vld [vmem:[%s4 + $0x2e0] sm:$0xff]
  %v722 = vld [vmem:[%s4 + $0x2fc] sm:$0xff]
  %v723 = vld [vmem:[%s4 + $0x318] sm:$0xff]
  %v724 = vld [vmem:[%s4 + $0x334] sm:$0xff]
  %v725 = vld [vmem:[%s4 + $0x350] sm:$0xff]
  %v726 = vld [vmem:[%s4 + $0x36c] sm:$0xff]
  %v727 = vld [vmem:[%s5 + $0x2] sm:$0x3]
  %v729 = vlaneseq
  %v730 = vshrl.u32 %v729, 7
  %v731 = vsub.s32 0, %v730
  %v732 = vrot.slane %v727, %v731
  %v733 = vlaneseq
  %v734 = vshrl.u32 %v733, 7
  %v735 = vsub.s32 1, %v734
  %v736 = vrot.slane %v727, %v735
  %v771 = vunpack.c.l.b16 %v695
  %v772 = vunpack.c.h.b16 %v695
  %v773 = vunpack.c.l.b16 %v696
  %v774 = vunpack.c.h.b16 %v696
  %v775 = vunpack.c.l.b16 %v697
  %v776 = vunpack.c.h.b16 %v697
  %v777 = vunpack.c.l.b16 %v698
  %v778 = vunpack.c.h.b16 %v698
  %v779 = vunpack.c.l.b16 %v699
  %v780 = vunpack.c.h.b16 %v699
  %v781 = vunpack.c.l.b16 %v700
  %v782 = vunpack.c.h.b16 %v700
  %v783 = vunpack.c.l.b16 %v701
  %v784 = vunpack.c.h.b16 %v701
  %v785 = vunpack.c.l.b16 %v702
  %v786 = vunpack.c.h.b16 %v702
  %v787 = vunpack.c.l.b16 %v703
  %v788 = vunpack.c.h.b16 %v703
  %v789 = vunpack.c.l.b16 %v704
  %v790 = vunpack.c.h.b16 %v704
  %v791 = vunpack.c.l.b16 %v705
  %v792 = vunpack.c.h.b16 %v705
  %v793 = vunpack.c.l.b16 %v706
  %v794 = vunpack.c.h.b16 %v706
  %v795 = vunpack.c.l.b16 %v707
  %v796 = vunpack.c.h.b16 %v707
  %v797 = vunpack.c.l.b16 %v708
  %v798 = vunpack.c.h.b16 %v708
  %v799 = vunpack.c.l.b16 %v709
  %v800 = vunpack.c.h.b16 %v709
  %v801 = vunpack.c.l.b16 %v710
  %v802 = vunpack.c.h.b16 %v710
  %v803 = vunpack.c.l.b16 %v711
  %v804 = vunpack.c.h.b16 %v711
  %v805 = vunpack.c.l.b16 %v712
  %v806 = vunpack.c.h.b16 %v712
  %v807 = vunpack.c.l.b16 %v713
  %v808 = vunpack.c.h.b16 %v713
  %v809 = vunpack.c.l.b16 %v714
  %v810 = vunpack.c.h.b16 %v714
  %v811 = vunpack.c.l.b16 %v715
  %v812 = vunpack.c.h.b16 %v715
  %v813 = vunpack.c.l.b16 %v716
  %v814 = vunpack.c.h.b16 %v716
  %v815 = vunpack.c.l.b16 %v717
  %v816 = vunpack.c.h.b16 %v717
  %v817 = vunpack.c.l.b16 %v718
  %v818 = vunpack.c.h.b16 %v718
  %v819 = vunpack.c.l.b16 %v719
  %v820 = vunpack.c.h.b16 %v719
  %v821 = vunpack.c.l.b16 %v720
  %v822 = vunpack.c.h.b16 %v720
  %v823 = vunpack.c.l.b16 %v721
  %v824 = vunpack.c.h.b16 %v721
  %v825 = vunpack.c.l.b16 %v722
  %v826 = vunpack.c.h.b16 %v722
  %v827 = vunpack.c.l.b16 %v723
  %v828 = vunpack.c.h.b16 %v723
  %v829 = vunpack.c.l.b16 %v724
  %v830 = vunpack.c.h.b16 %v724
  %v831 = vunpack.c.l.b16 %v725
  %v832 = vunpack.c.h.b16 %v725
  %v833 = vunpack.c.l.b16 %v726
  %v834 = vunpack.c.h.b16 %v726
  %v835 = vpack.c.b16 %v773, %v771
  %v836 = vpack.c.b16 %v774, %v772
  %v837 = vpack.c.b16 %v777, %v775
  %v838 = vpack.c.b16 %v778, %v776
  %v839 = vpack.c.b16 %v781, %v779
  %v840 = vpack.c.b16 %v782, %v780
  %v841 = vpack.c.b16 %v785, %v783
  %v842 = vpack.c.b16 %v786, %v784
  %v843 = vpack.c.b16 %v789, %v787
  %v844 = vpack.c.b16 %v790, %v788
  %v845 = vpack.c.b16 %v793, %v791
  %v846 = vpack.c.b16 %v794, %v792
  %v847 = vpack.c.b16 %v797, %v795
  %v848 = vpack.c.b16 %v798, %v796
  %v849 = vpack.c.b16 %v801, %v799
  %v850 = vpack.c.b16 %v802, %v800
  %v851 = vpack.c.b16 %v805, %v803
  %v852 = vpack.c.b16 %v806, %v804
  %v853 = vpack.c.b16 %v809, %v807
  %v854 = vpack.c.b16 %v810, %v808
  %v855 = vpack.c.b16 %v813, %v811
  %v856 = vpack.c.b16 %v814, %v812
  %v857 = vpack.c.b16 %v817, %v815
  %v858 = vpack.c.b16 %v818, %v816
  %v859 = vpack.c.b16 %v821, %v819
  %v860 = vpack.c.b16 %v822, %v820
  %v861 = vpack.c.b16 %v825, %v823
  %v862 = vpack.c.b16 %v826, %v824
  %v863 = vpack.c.b16 %v829, %v827
  %v864 = vpack.c.b16 %v830, %v828
  %v865 = vpack.c.b16 %v833, %v831
  %v866 = vpack.c.b16 %v834, %v832
  %899 = vmatprep.subr.bf16.mxu0 %v836
  %900 = vmatpush1.bf16.msra.mxu0 %v835
  %901 = vmatprep.subr.bf16.mxu0 %v838
  %902 = vmatpush1.bf16.msra.mxu0 %v837
  %903 = vmatprep.subr.bf16.mxu0 %v840
  %904 = vmatpush1.bf16.msra.mxu0 %v839
  %905 = vmatprep.subr.bf16.mxu0 %v842
  %906 = vmatpush1.bf16.msra.mxu0 %v841
  %907 = vmatprep.subr.bf16.mxu0 %v844
  %908 = vmatpush1.bf16.msra.mxu0 %v843
  %909 = vmatprep.subr.bf16.mxu0 %v846
  %910 = vmatpush1.bf16.msra.mxu0 %v845
  %911 = vmatprep.subr.bf16.mxu0 %v848
  %912 = vmatpush1.bf16.msra.mxu0 %v847
  %913 = vmatprep.subr.bf16.mxu0 %v850
  %914 = vmatpush1.bf16.msra.mxu0 %v849
  %915 = vmatprep.subr.bf16.mxu0 %v852
  %916 = vmatpush1.bf16.msra.mxu0 %v851
  %917 = vmatprep.subr.bf16.mxu0 %v854
  %918 = vmatpush1.bf16.msra.mxu0 %v853
  %919 = vmatprep.subr.bf16.mxu0 %v856
  %920 = vmatpush1.bf16.msra.mxu0 %v855
  %921 = vmatprep.subr.bf16.mxu0 %v858
  %922 = vmatpush1.bf16.msra.mxu0 %v857
  %923 = vmatprep.subr.bf16.mxu0 %v860
  %924 = vmatpush1.bf16.msra.mxu0 %v859
  %925 = vmatprep.subr.bf16.mxu0 %v862
  %926 = vmatpush1.bf16.msra.mxu0 %v861
  %927 = vmatprep.subr.bf16.mxu0 %v864
  %928 = vmatpush1.bf16.msra.mxu0 %v863
  %929 = vmatprep.subr.bf16.mxu0 %v866
  %930 = vmatpush1.bf16.msra.mxu0 %v865
  %931 = vmatprep.mubr.bf16.mxu0 %v429
  %932 = vmatmul.mubr.bf16.gmra.mrb[0].mxu0 %v428
  %v933 = vpop.f32.mrb[0].mxu0
  %v934 = vadd.f32 %v732, %v933
  %v935 = vpop.f32.mrb[0].mxu0
  %v936 = vadd.f32 %v736, %v935
  %v937 = vpop.f32.mrb[0].mxu0
  %v938 = vadd.f32 %v732, %v937
  %v939 = vpop.f32.mrb[0].mxu0
  %v940 = vadd.f32 %v736, %v939
  %941 = vdwg.mxu0
  %v942 = vtanh.pop %v934
  %v943 = vtanh.pop %v936
  %v944 = vtanh.pop %v938
  %v945 = vtanh.pop %v940
  %v946 = vpack.c.bf16 %v944, %v942
  %v947 = vpack.c.bf16 %v945, %v943
  %v950 = vunpack.c.l.b16 %v946
  %v951 = vunpack.c.l.b16 %v947
  %v952 = vunpack.c.h.b16 %v946
  %v953 = vunpack.c.h.b16 %v947
  %v954 = vpack.c.b16 %v951, %v950
  %v955 = vpack.c.b16 %v953, %v952
  %958 = vst [vmem:[%s6 + $0x8] sm:$0xff] %v954
  %959 = vst [vmem:[%s6 + $0x24] sm:$0xff] %v955
  %v960 = vld [vmem:[%s4 + $0x10] sm:$0xff]
  %v961 = vld [vmem:[%s4 + $0x18] sm:$0xf]
  %v962 = vld [vmem:[%s4 + $0x2c] sm:$0xff]
  %v963 = vld [vmem:[%s4 + $0x34] sm:$0xf]
  %v964 = vld [vmem:[%s4 + $0x48] sm:$0xff]
  %v965 = vld [vmem:[%s4 + $0x50] sm:$0xf]
  %v966 = vld [vmem:[%s4 + $0x64] sm:$0xff]
  %v967 = vld [vmem:[%s4 + $0x6c] sm:$0xf]
  %v968 = vld [vmem:[%s4 + $0x80] sm:$0xff]
  %v969 = vld [vmem:[%s4 + $0x88] sm:$0xf]
  %v970 = vld [vmem:[%s4 + $0x9c] sm:$0xff]
  %v971 = vld [vmem:[%s4 + $0xa4] sm:$0xf]
  %v972 = vld [vmem:[%s4 + $0xb8] sm:$0xff]
  %v973 = vld [vmem:[%s4 + $0xc0] sm:$0xf]
  %v974 = vld [vmem:[%s4 + $0xd4] sm:$0xff]
  %v975 = vld [vmem:[%s4 + $0xdc] sm:$0xf]
  %v976 = vld [vmem:[%s4 + $0xf0] sm:$0xff]
  %v977 = vld [vmem:[%s4 + $0xf8] sm:$0xf]
  %v978 = vld [vmem:[%s4 + $0x10c] sm:$0xff]
  %v979 = vld [vmem:[%s4 + $0x114] sm:$0xf]
  %v980 = vld [vmem:[%s4 + $0x128] sm:$0xff]
  %v981 = vld [vmem:[%s4 + $0x130] sm:$0xf]
  %v982 = vld [vmem:[%s4 + $0x144] sm:$0xff]
  %v983 = vld [vmem:[%s4 + $0x14c] sm:$0xf]
  %v984 = vld [vmem:[%s4 + $0x160] sm:$0xff]
  %v985 = vld [vmem:[%s4 + $0x168] sm:$0xf]
  %v986 = vld [vmem:[%s4 + $0x17c] sm:$0xff]
  %v987 = vld [vmem:[%s4 + $0x184] sm:$0xf]
  %v988 = vld [vmem:[%s4 + $0x198] sm:$0xff]
  %v989 = vld [vmem:[%s4 + $0x1a0] sm:$0xf]
  %v990 = vld [vmem:[%s4 + $0x1b4] sm:$0xff]
  %v991 = vld [vmem:[%s4 + $0x1bc] sm:$0xf]
  %v992 = vld [vmem:[%s4 + $0x1d0] sm:$0xff]
  %v993 = vld [vmem:[%s4 + $0x1d8] sm:$0xf]
  %v994 = vld [vmem:[%s4 + $0x1ec] sm:$0xff]
  %v995 = vld [vmem:[%s4 + $0x1f4] sm:$0xf]
  %v996 = vld [vmem:[%s4 + $0x208] sm:$0xff]
  %v997 = vld [vmem:[%s4 + $0x210] sm:$0xf]
  %v998 = vld [vmem:[%s4 + $0x224] sm:$0xff]
  %v999 = vld [vmem:[%s4 + $0x22c] sm:$0xf]
  %v1000 = vld [vmem:[%s4 + $0x240] sm:$0xff]
  %v1001 = vld [vmem:[%s4 + $0x248] sm:$0xf]
  %v1002 = vld [vmem:[%s4 + $0x25c] sm:$0xff]
  %v1003 = vld [vmem:[%s4 + $0x264] sm:$0xf]
  %v1004 = vld [vmem:[%s4 + $0x278] sm:$0xff]
  %v1005 = vld [vmem:[%s4 + $0x280] sm:$0xf]
  %v1006 = vld [vmem:[%s4 + $0x294] sm:$0xff]
  %v1007 = vld [vmem:[%s4 + $0x29c] sm:$0xf]
  %v1008 = vld [vmem:[%s4 + $0x2b0] sm:$0xff]
  %v1009 = vld [vmem:[%s4 + $0x2b8] sm:$0xf]
  %v1010 = vld [vmem:[%s4 + $0x2cc] sm:$0xff]
  %v1011 = vld [vmem:[%s4 + $0x2d4] sm:$0xf]
  %v1012 = vld [vmem:[%s4 + $0x2e8] sm:$0xff]
  %v1013 = vld [vmem:[%s4 + $0x2f0] sm:$0xf]
  %v1014 = vld [vmem:[%s4 + $0x304] sm:$0xff]
  %v1015 = vld [vmem:[%s4 + $0x30c] sm:$0xf]
  %v1016 = vld [vmem:[%s4 + $0x320] sm:$0xff]
  %v1017 = vld [vmem:[%s4 + $0x328] sm:$0xf]
  %v1018 = vld [vmem:[%s4 + $0x33c] sm:$0xff]
  %v1019 = vld [vmem:[%s4 + $0x344] sm:$0xf]
  %v1020 = vld [vmem:[%s4 + $0x358] sm:$0xff]
  %v1021 = vld [vmem:[%s4 + $0x360] sm:$0xf]
  %v1022 = vld [vmem:[%s4 + $0x374] sm:$0xff]
  %v1023 = vld [vmem:[%s4 + $0x37c] sm:$0xf]
  %v1024 = vld [vmem:[%s5 + $0x4] sm:$0x7]
  %v1026 = vlaneseq
  %v1027 = vshrl.u32 %v1026, 7
  %v1028 = vsub.s32 0, %v1027
  %v1029 = vrot.slane %v1024, %v1028
  %v1030 = vlaneseq
  %v1031 = vshrl.u32 %v1030, 7
  %v1032 = vsub.s32 1, %v1031
  %v1033 = vrot.slane %v1024, %v1032
  %v1034 = vlaneseq
  %v1035 = vshrl.u32 %v1034, 7
  %v1036 = vsub.s32 2, %v1035
  %v1037 = vrot.slane %v1024, %v1036
  %v1105 = vunpack.c.l.b16 %v960
  %v1106 = vunpack.c.h.b16 %v960
  %v1107 = vunpack.c.l.b16 %v961
  %v1108 = vunpack.c.l.b16 %v962
  %v1109 = vunpack.c.h.b16 %v962
  %v1110 = vunpack.c.l.b16 %v963
  %v1111 = vunpack.c.l.b16 %v964
  %v1112 = vunpack.c.h.b16 %v964
  %v1113 = vunpack.c.l.b16 %v965
  %v1114 = vunpack.c.l.b16 %v966
  %v1115 = vunpack.c.h.b16 %v966
  %v1116 = vunpack.c.l.b16 %v967
  %v1117 = vunpack.c.l.b16 %v968
  %v1118 = vunpack.c.h.b16 %v968
  %v1119 = vunpack.c.l.b16 %v969
  %v1120 = vunpack.c.l.b16 %v970
  %v1121 = vunpack.c.h.b16 %v970
  %v1122 = vunpack.c.l.b16 %v971
  %v1123 = vunpack.c.l.b16 %v972
  %v1124 = vunpack.c.h.b16 %v972
  %v1125 = vunpack.c.l.b16 %v973
  %v1126 = vunpack.c.l.b16 %v974
  %v1127 = vunpack.c.h.b16 %v974
  %v1128 = vunpack.c.l.b16 %v975
  %v1129 = vunpack.c.l.b16 %v976
  %v1130 = vunpack.c.h.b16 %v976
  %v1131 = vunpack.c.l.b16 %v977
  %v1132 = vunpack.c.l.b16 %v978
  %v1133 = vunpack.c.h.b16 %v978
  %v1134 = vunpack.c.l.b16 %v979
  %v1135 = vunpack.c.l.b16 %v980
  %v1136 = vunpack.c.h.b16 %v980
  %v1137 = vunpack.c.l.b16 %v981
  %v1138 = vunpack.c.l.b16 %v982
  %v1139 = vunpack.c.h.b16 %v982
  %v1140 = vunpack.c.l.b16 %v983
  %v1141 = vunpack.c.l.b16 %v984
  %v1142 = vunpack.c.h.b16 %v984
  %v1143 = vunpack.c.l.b16 %v985
  %v1144 = vunpack.c.l.b16 %v986
  %v1145 = vunpack.c.h.b16 %v986
  %v1146 = vunpack.c.l.b16 %v987
  %v1147 = vunpack.c.l.b16 %v988
  %v1148 = vunpack.c.h.b16 %v988
  %v1149 = vunpack.c.l.b16 %v989
  %v1150 = vunpack.c.l.b16 %v990
  %v1151 = vunpack.c.h.b16 %v990
  %v1152 = vunpack.c.l.b16 %v991
  %v1153 = vunpack.c.l.b16 %v992
  %v1154 = vunpack.c.h.b16 %v992
  %v1155 = vunpack.c.l.b16 %v993
  %v1156 = vunpack.c.l.b16 %v994
  %v1157 = vunpack.c.h.b16 %v994
  %v1158 = vunpack.c.l.b16 %v995
  %v1159 = vunpack.c.l.b16 %v996
  %v1160 = vunpack.c.h.b16 %v996
  %v1161 = vunpack.c.l.b16 %v997
  %v1162 = vunpack.c.l.b16 %v998
  %v1163 = vunpack.c.h.b16 %v998
  %v1164 = vunpack.c.l.b16 %v999
  %v1165 = vunpack.c.l.b16 %v1000
  %v1166 = vunpack.c.h.b16 %v1000
  %v1167 = vunpack.c.l.b16 %v1001
  %v1168 = vunpack.c.l.b16 %v1002
  %v1169 = vunpack.c.h.b16 %v1002
  %v1170 = vunpack.c.l.b16 %v1003
  %v1171 = vunpack.c.l.b16 %v1004
  %v1172 = vunpack.c.h.b16 %v1004
  %v1173 = vunpack.c.l.b16 %v1005
  %v1174 = vunpack.c.l.b16 %v1006
  %v1175 = vunpack.c.h.b16 %v1006
  %v1176 = vunpack.c.l.b16 %v1007
  %v1177 = vunpack.c.l.b16 %v1008
  %v1178 = vunpack.c.h.b16 %v1008
  %v1179 = vunpack.c.l.b16 %v1009
  %v1180 = vunpack.c.l.b16 %v1010
  %v1181 = vunpack.c.h.b16 %v1010
  %v1182 = vunpack.c.l.b16 %v1011
  %v1183 = vunpack.c.l.b16 %v1012
  %v1184 = vunpack.c.h.b16 %v1012
  %v1185 = vunpack.c.l.b16 %v1013
  %v1186 = vunpack.c.l.b16 %v1014
  %v1187 = vunpack.c.h.b16 %v1014
  %v1188 = vunpack.c.l.b16 %v1015
  %v1189 = vunpack.c.l.b16 %v1016
  %v1190 = vunpack.c.h.b16 %v1016
  %v1191 = vunpack.c.l.b16 %v1017
  %v1192 = vunpack.c.l.b16 %v1018
  %v1193 = vunpack.c.h.b16 %v1018
  %v1194 = vunpack.c.l.b16 %v1019
  %v1195 = vunpack.c.l.b16 %v1020
  %v1196 = vunpack.c.h.b16 %v1020
  %v1197 = vunpack.c.l.b16 %v1021
  %v1198 = vunpack.c.l.b16 %v1022
  %v1199 = vunpack.c.h.b16 %v1022
  %v1200 = vunpack.c.l.b16 %v1023
  %v1201 = vpack.c.b16 %v1108, %v1105
  %v1202 = vpack.c.b16 %v1109, %v1106
  %v1203 = vpack.c.b16 %v1110, %v1107
  %v1204 = vpack.c.b16 %v1114, %v1111
  %v1205 = vpack.c.b16 %v1115, %v1112
  %v1206 = vpack.c.b16 %v1116, %v1113
  %v1207 = vpack.c.b16 %v1120, %v1117
  %v1208 = vpack.c.b16 %v1121, %v1118
  %v1209 = vpack.c.b16 %v1122, %v1119
  %v1210 = vpack.c.b16 %v1126, %v1123
  %v1211 = vpack.c.b16 %v1127, %v1124
  %v1212 = vpack.c.b16 %v1128, %v1125
  %v1213 = vpack.c.b16 %v1132, %v1129
  %v1214 = vpack.c.b16 %v1133, %v1130
  %v1215 = vpack.c.b16 %v1134, %v1131
  %v1216 = vpack.c.b16 %v1138, %v1135
  %v1217 = vpack.c.b16 %v1139, %v1136
  %v1218 = vpack.c.b16 %v1140, %v1137
  %v1219 = vpack.c.b16 %v1144, %v1141
  %v1220 = vpack.c.b16 %v1145, %v1142
  %v1221 = vpack.c.b16 %v1146, %v1143
  %v1222 = vpack.c.b16 %v1150, %v1147
  %v1223 = vpack.c.b16 %v1151, %v1148
  %v1224 = vpack.c.b16 %v1152, %v1149
  %v1225 = vpack.c.b16 %v1156, %v1153
  %v1226 = vpack.c.b16 %v1157, %v1154
  %v1227 = vpack.c.b16 %v1158, %v1155
  %v1228 = vpack.c.b16 %v1162, %v1159
  %v1229 = vpack.c.b16 %v1163, %v1160
  %v1230 = vpack.c.b16 %v1164, %v1161
  %v1231 = vpack.c.b16 %v1168, %v1165
  %v1232 = vpack.c.b16 %v1169, %v1166
  %v1233 = vpack.c.b16 %v1170, %v1167
  %v1234 = vpack.c.b16 %v1174, %v1171
  %v1235 = vpack.c.b16 %v1175, %v1172
  %v1236 = vpack.c.b16 %v1176, %v1173
  %v1237 = vpack.c.b16 %v1180, %v1177
  %v1238 = vpack.c.b16 %v1181, %v1178
  %v1239 = vpack.c.b16 %v1182, %v1179
  %v1240 = vpack.c.b16 %v1186, %v1183
  %v1241 = vpack.c.b16 %v1187, %v1184
  %v1242 = vpack.c.b16 %v1188, %v1185
  %v1243 = vpack.c.b16 %v1192, %v1189
  %v1244 = vpack.c.b16 %v1193, %v1190
  %v1245 = vpack.c.b16 %v1194, %v1191
  %v1246 = vpack.c.b16 %v1198, %v1195
  %v1247 = vpack.c.b16 %v1199, %v1196
  %v1248 = vpack.c.b16 %v1200, %v1197
  %1297 = vmatprep.subr.bf16.mxu0 %v1202
  %1298 = vmatpush1.bf16.msra.mxu0 %v1201
  %1299 = vmatprep.subr.bf16.mxu0 %v1205
  %1300 = vmatpush1.bf16.msra.mxu0 %v1204
  %1301 = vmatprep.subr.bf16.mxu0 %v1208
  %1302 = vmatpush1.bf16.msra.mxu0 %v1207
  %1303 = vmatprep.subr.bf16.mxu0 %v1211
  %1304 = vmatpush1.bf16.msra.mxu0 %v1210
  %1305 = vmatprep.subr.bf16.mxu0 %v1214
  %1306 = vmatpush1.bf16.msra.mxu0 %v1213
  %1307 = vmatprep.subr.bf16.mxu0 %v1217
  %1308 = vmatpush1.bf16.msra.mxu0 %v1216
  %1309 = vmatprep.subr.bf16.mxu0 %v1220
  %1310 = vmatpush1.bf16.msra.mxu0 %v1219
  %1311 = vmatprep.subr.bf16.mxu0 %v1223
  %1312 = vmatpush1.bf16.msra.mxu0 %v1222
  %1313 = vmatprep.subr.bf16.mxu0 %v1226
  %1314 = vmatpush1.bf16.msra.mxu0 %v1225
  %1315 = vmatprep.subr.bf16.mxu0 %v1229
  %1316 = vmatpush1.bf16.msra.mxu0 %v1228
  %1317 = vmatprep.subr.bf16.mxu0 %v1232
  %1318 = vmatpush1.bf16.msra.mxu0 %v1231
  %1319 = vmatprep.subr.bf16.mxu0 %v1235
  %1320 = vmatpush1.bf16.msra.mxu0 %v1234
  %1321 = vmatprep.subr.bf16.mxu0 %v1238
  %1322 = vmatpush1.bf16.msra.mxu0 %v1237
  %1323 = vmatprep.subr.bf16.mxu0 %v1241
  %1324 = vmatpush1.bf16.msra.mxu0 %v1240
  %1325 = vmatprep.subr.bf16.mxu0 %v1244
  %1326 = vmatpush1.bf16.msra.mxu0 %v1243
  %1327 = vmatprep.subr.bf16.mxu0 %v1247
  %1328 = vmatpush1.bf16.msra.mxu0 %v1246
  %1329 = vmatprep.mubr.bf16.mxu0 %v429
  %1330 = vmatmul.mubr.bf16.gmra.mrb[0].mxu0 %v428
  %v1331 = vpop.f32.mrb[0].mxu0
  %v1332 = vadd.f32 %v1029, %v1331
  %v1333 = vpop.f32.mrb[0].mxu0
  %v1334 = vadd.f32 %v1033, %v1333
  %v1335 = vpop.f32.mrb[0].mxu0
  %v1336 = vadd.f32 %v1029, %v1335
  %v1337 = vpop.f32.mrb[0].mxu0
  %v1338 = vadd.f32 %v1033, %v1337
  %1339 = vdwg.mxu0
  %1340 = vmatprep.subr.bf16.mxu0 0
  %1341 = vmatpush1.bf16.msra.mxu0 %v1203
  %1342 = vmatprep.subr.bf16.mxu0 0
  %1343 = vmatpush1.bf16.msra.mxu0 %v1206
  %1344 = vmatprep.subr.bf16.mxu0 0
  %1345 = vmatpush1.bf16.msra.mxu0 %v1209
  %1346 = vmatprep.subr.bf16.mxu0 0
  %1347 = vmatpush1.bf16.msra.mxu0 %v1212
  %1348 = vmatprep.subr.bf16.mxu0 0
  %1349 = vmatpush1.bf16.msra.mxu0 %v1215
  %1350 = vmatprep.subr.bf16.mxu0 0
  %1351 = vmatpush1.bf16.msra.mxu0 %v1218
  %1352 = vmatprep.subr.bf16.mxu0 0
  %1353 = vmatpush1.bf16.msra.mxu0 %v1221
  %1354 = vmatprep.subr.bf16.mxu0 0
  %1355 = vmatpush1.bf16.msra.mxu0 %v1224
  %1356 = vmatprep.subr.bf16.mxu0 0
  %1357 = vmatpush1.bf16.msra.mxu0 %v1227
  %1358 = vmatprep.subr.bf16.mxu0 0
  %1359 = vmatpush1.bf16.msra.mxu0 %v1230
  %1360 = vmatprep.subr.bf16.mxu0 0
  %1361 = vmatpush1.bf16.msra.mxu0 %v1233
  %1362 = vmatprep.subr.bf16.mxu0 0
  %1363 = vmatpush1.bf16.msra.mxu0 %v1236
  %1364 = vmatprep.subr.bf16.mxu0 0
  %1365 = vmatpush1.bf16.msra.mxu0 %v1239
  %1366 = vmatprep.subr.bf16.mxu0 0
  %1367 = vmatpush1.bf16.msra.mxu0 %v1242
  %1368 = vmatprep.subr.bf16.mxu0 0
  %1369 = vmatpush1.bf16.msra.mxu0 %v1245
  %1370 = vmatprep.subr.bf16.mxu0 0
  %1371 = vmatpush1.bf16.msra.mxu0 %v1248
  %1372 = vmatprep.mubr.bf16.mxu0 %v429
  %1373 = vmatmul.mubr.bf16.gmra.mrb[0].mxu0 %v428
  %v1374 = vpop.f32.mrb[0].mxu0
  %v1375 = vadd.f32 %v1037, %v1374
  %v1376 = vpop.f32.mrb[0].mxu0
  %v1377 = vpop.f32.mrb[0].mxu0
  %v1378 = vadd.f32 %v1037, %v1377
  %v1379 = vpop.f32.mrb[0].mxu0
  %1380 = vdwg.mxu0
  %v1381 = vtanh.pop %v1332
  %v1382 = vtanh.pop %v1334
  %v1383 = vtanh.pop %v1375
  %v1384 = vtanh.pop %v1336
  %v1385 = vtanh.pop %v1338
  %v1386 = vtanh.pop %v1378
  %v1387 = vpack.c.bf16 %v1384, %v1381
  %v1388 = vpack.c.bf16 %v1385, %v1382
  %v1389 = vpack.c.bf16 %v1386, %v1383
  %v1393 = vunpack.c.l.b16 %v1387
  %v1394 = vunpack.c.l.b16 %v1388
  %v1395 = vunpack.c.l.b16 %v1389
  %v1396 = vunpack.c.h.b16 %v1387
  %v1397 = vunpack.c.h.b16 %v1388
  %v1398 = vunpack.c.h.b16 %v1389
  %v1399 = vpack.c.b16 %v1394, %v1393
  %v1400 = vpack.c.b16 %v1395, %v1395
  %v1401 = vpack.c.b16 %v1397, %v1396
  %v1402 = vpack.c.b16 %v1398, %v1398
  %1407 = vst [vmem:[%s6 + $0x10] sm:$0xff] %v1399
  %vm1408 = vcmask 125952
  %1409 = vst.msk [vmem:[%s6 + $0x18] sm:$0xf] %vm1408, %v1400
  %1410 = vst [vmem:[%s6 + $0x2c] sm:$0xff] %v1401
  %1411 = vst.msk [vmem:[%s6 + $0x34] sm:$0xf] %vm1408, %v1402
  // Predicated region
  $region26: #{generator_forward.1} parent=0 // pred_check
    _
  $region27: #{generator_forward.1} parent=0 // pred_check_branch
    %1413 = sbr.rel (0) target = $region29
  $region28: #{generator_forward.1} parent=0 // pred_region
    _
  $region29: #{generator_forward.1} parent=0 // pred_fallthru
    _
  // Predicated region
  $region30: #{generator_forward.1} parent=0 // pred_check
    _
  $region31: #{generator_forward.1} parent=0 // pred_check_branch
    %1415 = sbr.rel (0) target = $region33
  $region32: #{generator_forward.1} parent=0 // pred_region
    _
  $region33: #{generator_forward.1} parent=0 // pred_fallthru
    _

</llo_original>
